<compile_context>
chip_gen: v5e
topology: v5e:2x2
jax: 0.10.0
libtpu: 0.0.40
codegen_flags: <defaults>
</compile_context>

<pallas_src>
import jax
import jax.numpy as jnp
from jax.experimental import pallas as pl
from jax.experimental.pallas import tpu as pltpu


def _splitconv_kernel(a_ref, w_ref, o_ref):
    """Single fused MXU matmul: o = W_bd @ A (bias folded into the last K row).

    a_ref: (Ktot, M)   stacked transposed-im2col patches + ones row (lane-dense M)
    w_ref: (Rows, Ktot) block-diagonal per-split filters + bias column
    o_ref: (Rows, M)   lane-dense output (Rows = S*Cout, M = N*Hs*W)
    """
    o_ref[...] = jnp.dot(
        w_ref[...], a_ref[...],
        preferred_element_type=jnp.float32,
        precision=jax.lax.Precision.HIGHEST,   # full-f32 MXU contraction
    ).astype(o_ref.dtype)


def split_conv(x, weights, biases, *, n_splits, padding=1):
    """x: (N, Cin, H, W) NCHW.  weights: (n_splits, Cout, Cin, KH, KW) torch OIHW.
    biases: (n_splits, Cout).  Returns (N, n_splits*Cout, H//n_splits, W) NCHW."""
    N, Cin, H, W = x.shape
    S, Cout, _, KH, KW = weights.shape
    assert S == n_splits, (S, n_splits)
    assert H % n_splits == 0, "H must be divisible by n_splits (torch .split semantics)"
    Hs = H // n_splits
    p = padding
    Kdim = Cin * KH * KW        # 36, K order = (cin, kh, kw)
    M = N * Hs * W              # 256  (multiple of 128 -> unmasked lane-dense stores)
    Ktot = S * Kdim + 1         # 73   (+1 ones-row that folds the bias)
    Rows = S * Cout             # 16

    # ---- plain-JAX glue ------------------------------------------------------
    # Split along H and go channel-major BEFORE the 9x im2col expansion
    # (only the original-sized tensor is transposed).
    xs = x.reshape(N, Cin, S, Hs, W).transpose(2, 1, 0, 3, 4)        # (S,Cin,N,Hs,W)
    # Each split is zero-padded independently == Conv2d(padding=1) per split.
    x_pad = jnp.pad(xs, ((0, 0), (0, 0), (0, 0), (p, p), (p, p)))
    taps = [x_pad[:, :, :, i:i + Hs, j:j + W]                        # (S,Cin,N,Hs,W)
            for i in range(KH) for j in range(KW)]
    a = jnp.stack(taps, axis=2)                                      # (S,Cin,9,N,Hs,W)
    # Contiguous reshape: K = (cin, kh, kw), M = (n, y, x); splits stacked on K.
    a = a.reshape(S * Kdim, M)
    a_stack = jnp.concatenate([a, jnp.ones((1, M), x.dtype)], axis=0)  # (Ktot, M)

    # Torch OIHW reshapes directly into the matching (cin, kh, kw) K order.
    w = weights.reshape(S, Cout, Kdim)
    # Block-diagonal fused weight (exact fills, no matmul/scaling) + bias column.
    w_bd = jnp.zeros((Rows, S * Kdim), x.dtype)
    for s in range(S):
        w_bd = w_bd.at[s * Cout:(s + 1) * Cout, s * Kdim:(s + 1) * Kdim].set(w[s])
    w_full = jnp.concatenate(
        [w_bd, biases.reshape(Rows, 1).astype(x.dtype)], axis=1)     # (Rows, Ktot)

    # ---- single grid-less pallas_call: whole operands resident in VMEM ------
    out = pl.pallas_call(
        _splitconv_kernel,
        out_shape=jax.ShapeDtypeStruct((Rows, M), x.dtype),
        in_specs=[
            pl.BlockSpec(memory_space=pltpu.MemorySpace.VMEM),       # A (73, 256)
            pl.BlockSpec(memory_space=pltpu.MemorySpace.VMEM),       # W (16, 73)
        ],
        out_specs=pl.BlockSpec(memory_space=pltpu.MemorySpace.VMEM),  # (16, 256)
    )(a_stack, w_full)

    # Rows = (s, cout), M = (n, y, x) -> NCHW with channel index s*Cout + cout,
    # which matches torch.cat(per-split outputs, dim=1).
    out = out.reshape(S, Cout, N, Hs, W).transpose(2, 0, 1, 3, 4)
    return out.reshape(N, S * Cout, Hs, W)


def _reference_split_conv(x, weights, biases, *, n_splits, padding=1):
    """Pure-JAX reference (lax conv) for verification."""
    N, Cin, H, W = x.shape
    Hs = H // n_splits
    outs = []
    for s in range(n_splits):
        xi = x[:, :, s * Hs:(s + 1) * Hs, :]
        yi = jax.lax.conv_general_dilated(
            xi, weights[s], window_strides=(1, 1),
            padding=((padding, padding), (padding, padding)),
            dimension_numbers=("NCHW", "OIHW", "NCHW"),
            precision=jax.lax.Precision.HIGHEST)
        yi = yi + biases[s][None, :, None, None]
        outs.append(yi)
    return jnp.concatenate(outs, axis=1)


if __name__ == "__main__":
    # Module config: SplitConv(n_splits=2, in_channels=4, out_channels=8,
    #                          kernel_size=3, padding=1)
    n_splits, Cin, Cout, K, pad = 2, 4, 8, 3, 1
    N, H, W = 2, 16, 16

    key = jax.random.PRNGKey(0)
    kx, kw, kb = jax.random.split(key, 3)
    x = jax.random.normal(kx, (N, Cin, H, W), dtype=jnp.float32)
    weights = 0.1 * jax.random.normal(kw, (n_splits, Cout, Cin, K, K), dtype=jnp.float32)
    biases = 0.1 * jax.random.normal(kb, (n_splits, Cout), dtype=jnp.float32)

    y = split_conv(x, weights, biases, n_splits=n_splits, padding=pad)
    y = jax.block_until_ready(y)

    y_ref = _reference_split_conv(x, weights, biases, n_splits=n_splits, padding=pad)
    assert y.shape == (N, n_splits * Cout, H // n_splits, W), y.shape
    # Tight tolerance: the kernel contraction runs fully in f32 on the MXU
    # (precision=HIGHEST), so any layout/indexing regression shows up as O(1).
    err = float(jnp.max(jnp.abs(y - y_ref)))
    assert jnp.allclose(y, y_ref, atol=2e-5, rtol=2e-5), err

    print("KERNEL_OK")
</pallas_src>

<mosaic_0001>
module attributes {stable_mosaic.version = 11 : i64} {
  func.func @_splitconv_kernel(%arg0: memref<73x256xf32, #tpu.memory_space<vmem>>, %arg1: memref<16x73xf32, #tpu.memory_space<vmem>>, %arg2: memref<16x256xf32, #tpu.memory_space<vmem>>) attributes {dimension_semantics = [], scalar_prefetch = 0 : i64, scratch_operands = 0 : i64, tpu.core_type = #tpu.core_type<tc>} {
    %c0 = arith.constant 0 : index
    %c0_0 = arith.constant 0 : index
    %0 = vector.load %arg1[%c0, %c0_0] : memref<16x73xf32, #tpu.memory_space<vmem>>, vector<16x73xf32>
    %c0_1 = arith.constant 0 : index
    %c0_2 = arith.constant 0 : index
    %1 = vector.load %arg0[%c0_1, %c0_2] : memref<73x256xf32, #tpu.memory_space<vmem>>, vector<73x256xf32>
    %cst = arith.constant dense<0.000000e+00> : vector<16x256xf32>
    %2 = tpu.matmul %0, %1, %cst {dimension_numbers = #tpu.dot_dimension_numbers<[1], [0], [0], [1], [0, 0, 1, 1], [], []>, precision = #tpu.contract_precision<fp32>} : vector<16x73xf32>, vector<73x256xf32>, vector<16x256xf32> -> vector<16x256xf32>
    %c0_3 = arith.constant 0 : index
    %c0_4 = arith.constant 0 : index
    %3 = vector.load %arg2[%c0_3, %c0_4] : memref<16x256xf32, #tpu.memory_space<vmem>>, vector<16x256xf32>
    tpu.vector_store %arg2[%c0_3, %c0_4], %2 {strides = array<i32>} : memref<16x256xf32, #tpu.memory_space<vmem>>, vector<16x256xf32>,
    return
  }
}

</mosaic_0001>

<llo_original>
// kernel: tpu_custom_call.1
$region0: #{tpu_custom_call.1}
  #allocation0 [shape = 'u32[]', space=smem, size = 0x4, offset = 0x4, fixed_abs, tag = 'smem constant byte address 0x4 - core index']
  #allocation1 [shape = 'u32[72,128]{1,0:T(1,128)}', space=vmem, size = 0x9000, scoped, tag = 'internal scratch']
  %s0 = inlined_call_operand.hbm [shape: f32[73,256], index: 0, kind: input, shape index: {}]
  %s1 = inlined_call_operand.hbm [shape: f32[16,73], index: 1, kind: input, shape index: {}]
  %s2 = inlined_call_operand.hbm [shape: f32[16,256], index: 2, kind: output, shape index: {}]
  %s3 = sld [smem:[#allocation0]]
  $region26: #{tpu_custom_call.1} parent=0
    _
  %s5 = ssub.s32 1, %s3
  %s6 = scalar_select 0, %s5, %s3
  $region1: #{tpu_custom_call.1} parent=0
    #allocation2 [shape = 'u8[81920]{0}', space=vmem, size = 0x14000, scoped, tag = 'input window, operand 0, single buffered']
    #allocation3 [shape = 's32[1]{0}', space=sflag, size = 0x4, scoped, tag = 'scoped memory for tpu_custom_call.1']
    #allocation4 [shape = 's32[1]{0}', space=sflag, size = 0x4, scoped, tag = 'scoped memory for tpu_custom_call.1']
    #allocation5 [shape = 'u8[8192]{0}', space=vmem, size = 0x2000, scoped, tag = 'input window, operand 1, single buffered']
    #allocation6 [shape = 's32[1]{0}', space=sflag, size = 0x4, scoped, tag = 'scoped memory for tpu_custom_call.1']
    #allocation7 [shape = 'u8[16384]{0}', space=vmem, size = 0x4000, scoped, tag = 'output window, operand 0, single buffered']
    %7 = vsyncpa [#allocation3], 0
    %8 = vsyncpa [#allocation6], 0
    %9 = vsyncpa [#allocation4], 0
    // Predicated region
    $region2: #{tpu_custom_call.1} parent=1 // pred_check
      _
    $region3: #{tpu_custom_call.1} parent=1 // pred_check_branch
      %11 = sbr.rel (0) target = $region5
    $region4: #{tpu_custom_call.1} parent=1 // pred_region
      %13 = vsyncadd [#allocation3], 0
      %s14 = sshll.u32 %s0, 4
      %s15 = int_to_ptr.hbm [resolvable:$true] %s14
      %s16 = sshll.u32 [#allocation2], 4
      %s17 = int_to_ptr.vmem [resolvable:$true] %s16
      %22 = dma.hbm_to_vmem [thread:$0]  %s15, 2560, %s17, [#allocation3], 256, 256, 16
    $region5: #{tpu_custom_call.1} parent=1 // pred_fallthru
      _
    // Predicated region
    $region6: #{tpu_custom_call.1} parent=1 // pred_check
      _
    $region7: #{tpu_custom_call.1} parent=1 // pred_check_branch
      %24 = sbr.rel (0) target = $region9
    $region8: #{tpu_custom_call.1} parent=1 // pred_region
      %26 = vsyncadd [#allocation6], 0
      %s27 = sshll.u32 %s1, 4
      %s28 = int_to_ptr.hbm [resolvable:$true] %s27
      %s29 = sshll.u32 [#allocation5], 4
      %s30 = int_to_ptr.vmem [resolvable:$true] %s29
      %35 = dma.hbm_to_vmem [thread:$0]  %s28, 256, %s30, [#allocation6], 128, 128, 8
    $region9: #{tpu_custom_call.1} parent=1 // pred_fallthru
      _
    // Predicated region
    $region10: #{tpu_custom_call.1} parent=1 // pred_check
      _
    $region11: #{tpu_custom_call.1} parent=1 // pred_check_branch
      %37 = sbr.rel (0) target = $region13
    $region12: #{tpu_custom_call.1} parent=1 // pred_region
      %39 = dma.done [#allocation3], 2560
    $region13: #{tpu_custom_call.1} parent=1 // pred_fallthru
      _
    // Predicated region
    $region14: #{tpu_custom_call.1} parent=1 // pred_check
      _
    $region15: #{tpu_custom_call.1} parent=1 // pred_check_branch
      %41 = sbr.rel (0) target = $region17
    $region16: #{tpu_custom_call.1} parent=1 // pred_region
      %43 = dma.done [#allocation6], 256
    $region17: #{tpu_custom_call.1} parent=1 // pred_fallthru
      _
    %v44 = vld [vmem:[#allocation5] sm:$0xff]
    %v45 = vld [vmem:[#allocation5 + $0x8] sm:$0xff]
    %v46 = vld [vmem:[#allocation2] sm:$0xff]
    %v47 = vld [vmem:[#allocation2 + $0x8] sm:$0xff]
    %v48 = vld [vmem:[#allocation2 + $0x10] sm:$0xff]
    %v49 = vld [vmem:[#allocation2 + $0x18] sm:$0xff]
    %v50 = vld [vmem:[#allocation2 + $0x20] sm:$0xff]
    %v51 = vld [vmem:[#allocation2 + $0x28] sm:$0xff]
    %v52 = vld [vmem:[#allocation2 + $0x30] sm:$0xff]
    %v53 = vld [vmem:[#allocation2 + $0x38] sm:$0xff]
    %v54 = vld [vmem:[#allocation2 + $0x40] sm:$0xff]
    %v55 = vld [vmem:[#allocation2 + $0x48] sm:$0xff]
    %v56 = vld [vmem:[#allocation2 + $0x50] sm:$0xff]
    %v57 = vld [vmem:[#allocation2 + $0x58] sm:$0xff]
    %v58 = vld [vmem:[#allocation2 + $0x60] sm:$0xff]
    %v59 = vld [vmem:[#allocation2 + $0x68] sm:$0xff]
    %v60 = vld [vmem:[#allocation2 + $0x70] sm:$0xff]
    %v61 = vld [vmem:[#allocation2 + $0x78] sm:$0xff]
    %v62 = vld [vmem:[#allocation2 + $0x80] sm:$0xff]
    %v63 = vld [vmem:[#allocation2 + $0x88] sm:$0xff]
    %v64 = vld [vmem:[#allocation2 + $0x90] sm:$0x1]
    %v65 = vld [vmem:[#allocation2 + $0x98] sm:$0x1]
    %vm66 = vcmask 596992
    %v68 = vsel %vm66, %v44, 0
    %v71 = vsel %vm66, %v45, 0
    %vm73 = vcmask 1040384
    %v75 = vsel %vm73, %v64, 0
    %v78 = vsel %vm73, %v65, 0
    %80 = vmatpush.msra.mxu0 0.0
    %81 = vmatpush.msra.mxu0 0.0
    %82 = vmatpush.msra.mxu0 0.0
    %83 = vmatpush.msra.mxu0 0.0
    %84 = vmatpush.msra.mxu0 0.0
    %85 = vmatpush.msra.mxu0 0.0
    %v86 = vand.u32 %v75, 4294901760
    %87 = vmatpush.msra.mxu0 %v86
    %v88 = vand.u32 %v62, 4294901760
    %89 = vmatpush.msra.mxu0 %v88
    %v90 = vand.u32 %v60, 4294901760
    %91 = vmatpush.msra.mxu0 %v90
    %v92 = vand.u32 %v58, 4294901760
    %93 = vmatpush.msra.mxu0 %v92
    %v94 = vand.u32 %v56, 4294901760
    %95 = vmatpush.msra.mxu0 %v94
    %v96 = vand.u32 %v54, 4294901760
    %97 = vmatpush.msra.mxu0 %v96
    %v98 = vand.u32 %v52, 4294901760
    %99 = vmatpush.msra.mxu0 %v98
    %v100 = vand.u32 %v50, 4294901760
    %101 = vmatpush.msra.mxu0 %v100
    %v102 = vand.u32 %v48, 4294901760
    %103 = vmatpush.msra.mxu0 %v102
    %v104 = vand.u32 %v46, 4294901760
    %105 = vmatpush.msra.mxu0 %v104
    %v106 = vand.u32 %v68, 4294901760
    %v107 = vsub.f32 %v68, %v106
    %v108 = vand.u32 %v107, 4294901760
    %v109 = vsub.f32 %v107, %v108
    %v110 = vand.u32 %v109, 4294901760
    %111 = vmatmul.f32.gmra.mxu0 %v110
    %v112 = vpop.f32.mrf.mxu0
    %v113 = vadd.f32 0.0, %v112
    %v114 = vand.u32 %v71, 4294901760
    %v115 = vsub.f32 %v71, %v114
    %v116 = vand.u32 %v115, 4294901760
    %v117 = vsub.f32 %v115, %v116
    %v118 = vand.u32 %v117, 4294901760
    %119 = vmatmul.f32.gmra.mxu0 %v118
    %v120 = vpop.f32.mrf.mxu0
    %v121 = vadd.f32 0.0, %v120
    %122 = vdwg.mxu0
    %123 = vmatpush.msra.mxu0 0.0
    %124 = vmatpush.msra.mxu0 0.0
    %125 = vmatpush.msra.mxu0 0.0
    %126 = vmatpush.msra.mxu0 0.0
    %127 = vmatpush.msra.mxu0 0.0
    %128 = vmatpush.msra.mxu0 0.0
    %v129 = vand.u32 %v75, 4294901760
    %v130 = vsub.f32 %v75, %v129
    %v131 = vand.u32 %v130, 4294901760
    %v132 = vsub.f32 %v130, %v131
    %v133 = vand.u32 %v132, 4294901760
    %134 = vmatpush.msra.mxu0 %v133
    %v135 = vand.u32 %v62, 4294901760
    %v136 = vsub.f32 %v62, %v135
    %v137 = vand.u32 %v136, 4294901760
    %v138 = vsub.f32 %v136, %v137
    %v139 = vand.u32 %v138, 4294901760
    %140 = vmatpush.msra.mxu0 %v139
    %v141 = vand.u32 %v60, 4294901760
    %v142 = vsub.f32 %v60, %v141
    %v143 = vand.u32 %v142, 4294901760
    %v144 = vsub.f32 %v142, %v143
    %v145 = vand.u32 %v144, 4294901760
    %146 = vmatpush.msra.mxu0 %v145
    %v147 = vand.u32 %v58, 4294901760
    %v148 = vsub.f32 %v58, %v147
    %v149 = vand.u32 %v148, 4294901760
    %v150 = vsub.f32 %v148, %v149
    %v151 = vand.u32 %v150, 4294901760
    %152 = vmatpush.msra.mxu0 %v151
    %v153 = vand.u32 %v56, 4294901760
    %v154 = vsub.f32 %v56, %v153
    %v155 = vand.u32 %v154, 4294901760
    %v156 = vsub.f32 %v154, %v155
    %v157 = vand.u32 %v156, 4294901760
    %158 = vmatpush.msra.mxu0 %v157
    %v159 = vand.u32 %v54, 4294901760
    %v160 = vsub.f32 %v54, %v159
    %v161 = vand.u32 %v160, 4294901760
    %v162 = vsub.f32 %v160, %v161
    %v163 = vand.u32 %v162, 4294901760
    %164 = vmatpush.msra.mxu0 %v163
    %v165 = vand.u32 %v52, 4294901760
    %v166 = vsub.f32 %v52, %v165
    %v167 = vand.u32 %v166, 4294901760
    %v168 = vsub.f32 %v166, %v167
    %v169 = vand.u32 %v168, 4294901760
    %170 = vmatpush.msra.mxu0 %v169
    %v171 = vand.u32 %v50, 4294901760
    %v172 = vsub.f32 %v50, %v171
    %v173 = vand.u32 %v172, 4294901760
    %v174 = vsub.f32 %v172, %v173
    %v175 = vand.u32 %v174, 4294901760
    %176 = vmatpush.msra.mxu0 %v175
    %v177 = vand.u32 %v48, 4294901760
    %v178 = vsub.f32 %v48, %v177
    %v179 = vand.u32 %v178, 4294901760
    %v180 = vsub.f32 %v178, %v179
    %v181 = vand.u32 %v180, 4294901760
    %182 = vmatpush.msra.mxu0 %v181
    %v183 = vand.u32 %v46, 4294901760
    %v184 = vsub.f32 %v46, %v183
    %v185 = vand.u32 %v184, 4294901760
    %v186 = vsub.f32 %v184, %v185
    %v187 = vand.u32 %v186, 4294901760
    %188 = vmatpush.msra.mxu0 %v187
    %v189 = vand.u32 %v68, 4294901760
    %190 = vmatmul.f32.gmra.mxu0 %v189
    %v191 = vpop.f32.mrf.mxu0
    %v192 = vadd.f32 %v113, %v191
    %v193 = vand.u32 %v71, 4294901760
    %194 = vmatmul.f32.gmra.mxu0 %v193
    %v195 = vpop.f32.mrf.mxu0
    %v196 = vadd.f32 %v121, %v195
    %197 = vdwg.mxu0
    %198 = vmatpush.msra.mxu0 0.0
    %199 = vmatpush.msra.mxu0 0.0
    %200 = vmatpush.msra.mxu0 0.0
    %201 = vmatpush.msra.mxu0 0.0
    %202 = vmatpush.msra.mxu0 0.0
    %203 = vmatpush.msra.mxu0 0.0
    %v204 = vand.u32 %v75, 4294901760
    %v205 = vsub.f32 %v75, %v204
    %206 = vmatpush.msra.mxu0 %v205
    %v207 = vand.u32 %v62, 4294901760
    %v208 = vsub.f32 %v62, %v207
    %209 = vmatpush.msra.mxu0 %v208
    %v210 = vand.u32 %v60, 4294901760
    %v211 = vsub.f32 %v60, %v210
    %212 = vmatpush.msra.mxu0 %v211
    %v213 = vand.u32 %v58, 4294901760
    %v214 = vsub.f32 %v58, %v213
    %215 = vmatpush.msra.mxu0 %v214
    %v216 = vand.u32 %v56, 4294901760
    %v217 = vsub.f32 %v56, %v216
    %218 = vmatpush.msra.mxu0 %v217
    %v219 = vand.u32 %v54, 4294901760
    %v220 = vsub.f32 %v54, %v219
    %221 = vmatpush.msra.mxu0 %v220
    %v222 = vand.u32 %v52, 4294901760
    %v223 = vsub.f32 %v52, %v222
    %224 = vmatpush.msra.mxu0 %v223
    %v225 = vand.u32 %v50, 4294901760
    %v226 = vsub.f32 %v50, %v225
    %227 = vmatpush.msra.mxu0 %v226
    %v228 = vand.u32 %v48, 4294901760
    %v229 = vsub.f32 %v48, %v228
    %230 = vmatpush.msra.mxu0 %v229
    %v231 = vand.u32 %v46, 4294901760
    %v232 = vsub.f32 %v46, %v231
    %233 = vmatpush.msra.mxu0 %v232
    %v234 = vand.u32 %v68, 4294901760
    %v235 = vsub.f32 %v68, %v234
    %236 = vmatmul.f32.gmra.mxu0 %v235
    %v237 = vpop.f32.mrf.mxu0
    %v238 = vadd.f32 %v192, %v237
    %v239 = vand.u32 %v71, 4294901760
    %v240 = vsub.f32 %v71, %v239
    %241 = vmatmul.f32.gmra.mxu0 %v240
    %v242 = vpop.f32.mrf.mxu0
    %v243 = vadd.f32 %v196, %v242
    %244 = vdwg.mxu0
    %245 = vmatpush.msra.mxu0 0.0
    %246 = vmatpush.msra.mxu0 0.0
    %247 = vmatpush.msra.mxu0 0.0
    %248 = vmatpush.msra.mxu0 0.0
    %249 = vmatpush.msra.mxu0 0.0
    %250 = vmatpush.msra.mxu0 0.0
    %v251 = vand.u32 %v75, 4294901760
    %252 = vmatpush.msra.mxu0 %v251
    %v253 = vand.u32 %v62, 4294901760
    %254 = vmatpush.msra.mxu0 %v253
    %v255 = vand.u32 %v60, 4294901760
    %256 = vmatpush.msra.mxu0 %v255
    %v257 = vand.u32 %v58, 4294901760
    %258 = vmatpush.msra.mxu0 %v257
    %v259 = vand.u32 %v56, 4294901760
    %260 = vmatpush.msra.mxu0 %v259
    %v261 = vand.u32 %v54, 4294901760
    %262 = vmatpush.msra.mxu0 %v261
    %v263 = vand.u32 %v52, 4294901760
    %264 = vmatpush.msra.mxu0 %v263
    %v265 = vand.u32 %v50, 4294901760
    %266 = vmatpush.msra.mxu0 %v265
    %v267 = vand.u32 %v48, 4294901760
    %268 = vmatpush.msra.mxu0 %v267
    %v269 = vand.u32 %v46, 4294901760
    %270 = vmatpush.msra.mxu0 %v269
    %v271 = vand.u32 %v68, 4294901760
    %v272 = vsub.f32 %v68, %v271
    %v273 = vand.u32 %v272, 4294901760
    %274 = vmatmul.f32.gmra.mxu0 %v273
    %v275 = vpop.f32.mrf.mxu0
    %v276 = vadd.f32 %v238, %v275
    %v277 = vand.u32 %v71, 4294901760
    %v278 = vsub.f32 %v71, %v277
    %v279 = vand.u32 %v278, 4294901760
    %280 = vmatmul.f32.gmra.mxu0 %v279
    %v281 = vpop.f32.mrf.mxu0
    %v282 = vadd.f32 %v243, %v281
    %283 = vdwg.mxu0
    %284 = vmatpush.msra.mxu0 0.0
    %285 = vmatpush.msra.mxu0 0.0
    %286 = vmatpush.msra.mxu0 0.0
    %287 = vmatpush.msra.mxu0 0.0
    %288 = vmatpush.msra.mxu0 0.0
    %289 = vmatpush.msra.mxu0 0.0
    %v290 = vand.u32 %v75, 4294901760
    %v291 = vsub.f32 %v75, %v290
    %v292 = vand.u32 %v291, 4294901760
    %293 = vmatpush.msra.mxu0 %v292
    %v294 = vand.u32 %v62, 4294901760
    %v295 = vsub.f32 %v62, %v294
    %v296 = vand.u32 %v295, 4294901760
    %297 = vmatpush.msra.mxu0 %v296
    %v298 = vand.u32 %v60, 4294901760
    %v299 = vsub.f32 %v60, %v298
    %v300 = vand.u32 %v299, 4294901760
    %301 = vmatpush.msra.mxu0 %v300
    %v302 = vand.u32 %v58, 4294901760
    %v303 = vsub.f32 %v58, %v302
    %v304 = vand.u32 %v303, 4294901760
    %305 = vmatpush.msra.mxu0 %v304
    %v306 = vand.u32 %v56, 4294901760
    %v307 = vsub.f32 %v56, %v306
    %v308 = vand.u32 %v307, 4294901760
    %309 = vmatpush.msra.mxu0 %v308
    %v310 = vand.u32 %v54, 4294901760
    %v311 = vsub.f32 %v54, %v310
    %v312 = vand.u32 %v311, 4294901760
    %313 = vmatpush.msra.mxu0 %v312
    %v314 = vand.u32 %v52, 4294901760
    %v315 = vsub.f32 %v52, %v314
    %v316 = vand.u32 %v315, 4294901760
    %317 = vmatpush.msra.mxu0 %v316
    %v318 = vand.u32 %v50, 4294901760
    %v319 = vsub.f32 %v50, %v318
    %v320 = vand.u32 %v319, 4294901760
    %321 = vmatpush.msra.mxu0 %v320
    %v322 = vand.u32 %v48, 4294901760
    %v323 = vsub.f32 %v48, %v322
    %v324 = vand.u32 %v323, 4294901760
    %325 = vmatpush.msra.mxu0 %v324
    %v326 = vand.u32 %v46, 4294901760
    %v327 = vsub.f32 %v46, %v326
    %v328 = vand.u32 %v327, 4294901760
    %329 = vmatpush.msra.mxu0 %v328
    %v330 = vand.u32 %v68, 4294901760
    %331 = vmatmul.f32.gmra.mxu0 %v330
    %v332 = vpop.f32.mrf.mxu0
    %v333 = vadd.f32 %v276, %v332
    %v334 = vand.u32 %v71, 4294901760
    %335 = vmatmul.f32.gmra.mxu0 %v334
    %v336 = vpop.f32.mrf.mxu0
    %v337 = vadd.f32 %v282, %v336
    %338 = vdwg.mxu0
    %339 = vmatpush.msra.mxu0 0.0
    %340 = vmatpush.msra.mxu0 0.0
    %341 = vmatpush.msra.mxu0 0.0
    %342 = vmatpush.msra.mxu0 0.0
    %343 = vmatpush.msra.mxu0 0.0
    %344 = vmatpush.msra.mxu0 0.0
    %v345 = vand.u32 %v75, 4294901760
    %346 = vmatpush.msra.mxu0 %v345
    %v347 = vand.u32 %v62, 4294901760
    %348 = vmatpush.msra.mxu0 %v347
    %v349 = vand.u32 %v60, 4294901760
    %350 = vmatpush.msra.mxu0 %v349
    %v351 = vand.u32 %v58, 4294901760
    %352 = vmatpush.msra.mxu0 %v351
    %v353 = vand.u32 %v56, 4294901760
    %354 = vmatpush.msra.mxu0 %v353
    %v355 = vand.u32 %v54, 4294901760
    %356 = vmatpush.msra.mxu0 %v355
    %v357 = vand.u32 %v52, 4294901760
    %358 = vmatpush.msra.mxu0 %v357
    %v359 = vand.u32 %v50, 4294901760
    %360 = vmatpush.msra.mxu0 %v359
    %v361 = vand.u32 %v48, 4294901760
    %362 = vmatpush.msra.mxu0 %v361
    %v363 = vand.u32 %v46, 4294901760
    %364 = vmatpush.msra.mxu0 %v363
    %v365 = vand.u32 %v68, 4294901760
    %366 = vmatmul.f32.gmra.mxu0 %v365
    %v367 = vpop.f32.mrf.mxu0
    %v368 = vadd.f32 %v333, %v367
    %v369 = vand.u32 %v71, 4294901760
    %370 = vmatmul.f32.gmra.mxu0 %v369
    %v371 = vpop.f32.mrf.mxu0
    %v372 = vadd.f32 %v337, %v371
    %373 = vdwg.mxu0
    %374 = vmatpush.msra.mxu0 0.0
    %375 = vmatpush.msra.mxu0 0.0
    %376 = vmatpush.msra.mxu0 0.0
    %377 = vmatpush.msra.mxu0 0.0
    %378 = vmatpush.msra.mxu0 0.0
    %379 = vmatpush.msra.mxu0 0.0
    %v380 = vand.u32 %v78, 4294901760
    %381 = vmatpush.msra.mxu0 %v380
    %v382 = vand.u32 %v63, 4294901760
    %383 = vmatpush.msra.mxu0 %v382
    %v384 = vand.u32 %v61, 4294901760
    %385 = vmatpush.msra.mxu0 %v384
    %v386 = vand.u32 %v59, 4294901760
    %387 = vmatpush.msra.mxu0 %v386
    %v388 = vand.u32 %v57, 4294901760
    %389 = vmatpush.msra.mxu0 %v388
    %v390 = vand.u32 %v55, 4294901760
    %391 = vmatpush.msra.mxu0 %v390
    %v392 = vand.u32 %v53, 4294901760
    %393 = vmatpush.msra.mxu0 %v392
    %v394 = vand.u32 %v51, 4294901760
    %395 = vmatpush.msra.mxu0 %v394
    %v396 = vand.u32 %v49, 4294901760
    %397 = vmatpush.msra.mxu0 %v396
    %v398 = vand.u32 %v47, 4294901760
    %399 = vmatpush.msra.mxu0 %v398
    %v400 = vand.u32 %v68, 4294901760
    %v401 = vsub.f32 %v68, %v400
    %v402 = vand.u32 %v401, 4294901760
    %v403 = vsub.f32 %v401, %v402
    %v404 = vand.u32 %v403, 4294901760
    %405 = vmatmul.f32.gmra.mxu0 %v404
    %v406 = vpop.f32.mrf.mxu0
    %v407 = vadd.f32 0.0, %v406
    %v408 = vand.u32 %v71, 4294901760
    %v409 = vsub.f32 %v71, %v408
    %v410 = vand.u32 %v409, 4294901760
    %v411 = vsub.f32 %v409, %v410
    %v412 = vand.u32 %v411, 4294901760
    %413 = vmatmul.f32.gmra.mxu0 %v412
    %v414 = vpop.f32.mrf.mxu0
    %v415 = vadd.f32 0.0, %v414
    %416 = vdwg.mxu0
    %417 = vmatpush.msra.mxu0 0.0
    %418 = vmatpush.msra.mxu0 0.0
    %419 = vmatpush.msra.mxu0 0.0
    %420 = vmatpush.msra.mxu0 0.0
    %421 = vmatpush.msra.mxu0 0.0
    %422 = vmatpush.msra.mxu0 0.0
    %v423 = vand.u32 %v78, 4294901760
    %v424 = vsub.f32 %v78, %v423
    %v425 = vand.u32 %v424, 4294901760
    %v426 = vsub.f32 %v424, %v425
    %v427 = vand.u32 %v426, 4294901760
    %428 = vmatpush.msra.mxu0 %v427
    %v429 = vand.u32 %v63, 4294901760
    %v430 = vsub.f32 %v63, %v429
    %v431 = vand.u32 %v430, 4294901760
    %v432 = vsub.f32 %v430, %v431
    %v433 = vand.u32 %v432, 4294901760
    %434 = vmatpush.msra.mxu0 %v433
    %v435 = vand.u32 %v61, 4294901760
    %v436 = vsub.f32 %v61, %v435
    %v437 = vand.u32 %v436, 4294901760
    %v438 = vsub.f32 %v436, %v437
    %v439 = vand.u32 %v438, 4294901760
    %440 = vmatpush.msra.mxu0 %v439
    %v441 = vand.u32 %v59, 4294901760
    %v442 = vsub.f32 %v59, %v441
    %v443 = vand.u32 %v442, 4294901760
    %v444 = vsub.f32 %v442, %v443
    %v445 = vand.u32 %v444, 4294901760
    %446 = vmatpush.msra.mxu0 %v445
    %v447 = vand.u32 %v57, 4294901760
    %v448 = vsub.f32 %v57, %v447
    %v449 = vand.u32 %v448, 4294901760
    %v450 = vsub.f32 %v448, %v449
    %v451 = vand.u32 %v450, 4294901760
    %452 = vmatpush.msra.mxu0 %v451
    %v453 = vand.u32 %v55, 4294901760
    %v454 = vsub.f32 %v55, %v453
    %v455 = vand.u32 %v454, 4294901760
    %v456 = vsub.f32 %v454, %v455
    %v457 = vand.u32 %v456, 4294901760
    %458 = vmatpush.msra.mxu0 %v457
    %v459 = vand.u32 %v53, 4294901760
    %v460 = vsub.f32 %v53, %v459
    %v461 = vand.u32 %v460, 4294901760
    %v462 = vsub.f32 %v460, %v461
    %v463 = vand.u32 %v462, 4294901760
    %464 = vmatpush.msra.mxu0 %v463
    %v465 = vand.u32 %v51, 4294901760
    %v466 = vsub.f32 %v51, %v465
    %v467 = vand.u32 %v466, 4294901760
    %v468 = vsub.f32 %v466, %v467
    %v469 = vand.u32 %v468, 4294901760
    %470 = vmatpush.msra.mxu0 %v469
    %v471 = vand.u32 %v49, 4294901760
    %v472 = vsub.f32 %v49, %v471
    %v473 = vand.u32 %v472, 4294901760
    %v474 = vsub.f32 %v472, %v473
    %v475 = vand.u32 %v474, 4294901760
    %476 = vmatpush.msra.mxu0 %v475
    %v477 = vand.u32 %v47, 4294901760
    %v478 = vsub.f32 %v47, %v477
    %v479 = vand.u32 %v478, 4294901760
    %v480 = vsub.f32 %v478, %v479
    %v481 = vand.u32 %v480, 4294901760
    %482 = vmatpush.msra.mxu0 %v481
    %v483 = vand.u32 %v68, 4294901760
    %484 = vmatmul.f32.gmra.mxu0 %v483
    %v485 = vpop.f32.mrf.mxu0
    %v486 = vadd.f32 %v407, %v485
    %v487 = vand.u32 %v71, 4294901760
    %488 = vmatmul.f32.gmra.mxu0 %v487
    %v489 = vpop.f32.mrf.mxu0
    %v490 = vadd.f32 %v415, %v489
    %491 = vdwg.mxu0
    %492 = vmatpush.msra.mxu0 0.0
    %493 = vmatpush.msra.mxu0 0.0
    %494 = vmatpush.msra.mxu0 0.0
    %495 = vmatpush.msra.mxu0 0.0
    %496 = vmatpush.msra.mxu0 0.0
    %497 = vmatpush.msra.mxu0 0.0
    %v498 = vand.u32 %v78, 4294901760
    %v499 = vsub.f32 %v78, %v498
    %500 = vmatpush.msra.mxu0 %v499
    %v501 = vand.u32 %v63, 4294901760
    %v502 = vsub.f32 %v63, %v501
    %503 = vmatpush.msra.mxu0 %v502
    %v504 = vand.u32 %v61, 4294901760
    %v505 = vsub.f32 %v61, %v504
    %506 = vmatpush.msra.mxu0 %v505
    %v507 = vand.u32 %v59, 4294901760
    %v508 = vsub.f32 %v59, %v507
    %509 = vmatpush.msra.mxu0 %v508
    %v510 = vand.u32 %v57, 4294901760
    %v511 = vsub.f32 %v57, %v510
    %512 = vmatpush.msra.mxu0 %v511
    %v513 = vand.u32 %v55, 4294901760
    %v514 = vsub.f32 %v55, %v513
    %515 = vmatpush.msra.mxu0 %v514
    %v516 = vand.u32 %v53, 4294901760
    %v517 = vsub.f32 %v53, %v516
    %518 = vmatpush.msra.mxu0 %v517
    %v519 = vand.u32 %v51, 4294901760
    %v520 = vsub.f32 %v51, %v519
    %521 = vmatpush.msra.mxu0 %v520
    %v522 = vand.u32 %v49, 4294901760
    %v523 = vsub.f32 %v49, %v522
    %524 = vmatpush.msra.mxu0 %v523
    %v525 = vand.u32 %v47, 4294901760
    %v526 = vsub.f32 %v47, %v525
    %527 = vmatpush.msra.mxu0 %v526
    %v528 = vand.u32 %v68, 4294901760
    %v529 = vsub.f32 %v68, %v528
    %530 = vmatmul.f32.gmra.mxu0 %v529
    %v531 = vpop.f32.mrf.mxu0
    %v532 = vadd.f32 %v486, %v531
    %v533 = vand.u32 %v71, 4294901760
    %v534 = vsub.f32 %v71, %v533
    %535 = vmatmul.f32.gmra.mxu0 %v534
    %v536 = vpop.f32.mrf.mxu0
    %v537 = vadd.f32 %v490, %v536
    %538 = vdwg.mxu0
    %539 = vmatpush.msra.mxu0 0.0
    %540 = vmatpush.msra.mxu0 0.0
    %541 = vmatpush.msra.mxu0 0.0
    %542 = vmatpush.msra.mxu0 0.0
    %543 = vmatpush.msra.mxu0 0.0
    %544 = vmatpush.msra.mxu0 0.0
    %v545 = vand.u32 %v78, 4294901760
    %546 = vmatpush.msra.mxu0 %v545
    %v547 = vand.u32 %v63, 4294901760
    %548 = vmatpush.msra.mxu0 %v547
    %v549 = vand.u32 %v61, 4294901760
    %550 = vmatpush.msra.mxu0 %v549
    %v551 = vand.u32 %v59, 4294901760
    %552 = vmatpush.msra.mxu0 %v551
    %v553 = vand.u32 %v57, 4294901760
    %554 = vmatpush.msra.mxu0 %v553
    %v555 = vand.u32 %v55, 4294901760
    %556 = vmatpush.msra.mxu0 %v555
    %v557 = vand.u32 %v53, 4294901760
    %558 = vmatpush.msra.mxu0 %v557
    %v559 = vand.u32 %v51, 4294901760
    %560 = vmatpush.msra.mxu0 %v559
    %v561 = vand.u32 %v49, 4294901760
    %562 = vmatpush.msra.mxu0 %v561
    %v563 = vand.u32 %v47, 4294901760
    %564 = vmatpush.msra.mxu0 %v563
    %v565 = vand.u32 %v68, 4294901760
    %v566 = vsub.f32 %v68, %v565
    %v567 = vand.u32 %v566, 4294901760
    %568 = vmatmul.f32.gmra.mxu0 %v567
    %v569 = vpop.f32.mrf.mxu0
    %v570 = vadd.f32 %v532, %v569
    %v571 = vand.u32 %v71, 4294901760
    %v572 = vsub.f32 %v71, %v571
    %v573 = vand.u32 %v572, 4294901760
    %574 = vmatmul.f32.gmra.mxu0 %v573
    %v575 = vpop.f32.mrf.mxu0
    %v576 = vadd.f32 %v537, %v575
    %577 = vdwg.mxu0
    %578 = vmatpush.msra.mxu0 0.0
    %579 = vmatpush.msra.mxu0 0.0
    %580 = vmatpush.msra.mxu0 0.0
    %581 = vmatpush.msra.mxu0 0.0
    %582 = vmatpush.msra.mxu0 0.0
    %583 = vmatpush.msra.mxu0 0.0
    %v584 = vand.u32 %v78, 4294901760
    %v585 = vsub.f32 %v78, %v584
    %v586 = vand.u32 %v585, 4294901760
    %587 = vmatpush.msra.mxu0 %v586
    %v588 = vand.u32 %v63, 4294901760
    %v589 = vsub.f32 %v63, %v588
    %v590 = vand.u32 %v589, 4294901760
    %591 = vmatpush.msra.mxu0 %v590
    %v592 = vand.u32 %v61, 4294901760
    %v593 = vsub.f32 %v61, %v592
    %v594 = vand.u32 %v593, 4294901760
    %595 = vmatpush.msra.mxu0 %v594
    %v596 = vand.u32 %v59, 4294901760
    %v597 = vsub.f32 %v59, %v596
    %v598 = vand.u32 %v597, 4294901760
    %599 = vmatpush.msra.mxu0 %v598
    %v600 = vand.u32 %v57, 4294901760
    %v601 = vsub.f32 %v57, %v600
    %v602 = vand.u32 %v601, 4294901760
    %603 = vmatpush.msra.mxu0 %v602
    %v604 = vand.u32 %v55, 4294901760
    %v605 = vsub.f32 %v55, %v604
    %v606 = vand.u32 %v605, 4294901760
    %607 = vmatpush.msra.mxu0 %v606
    %v608 = vand.u32 %v53, 4294901760
    %v609 = vsub.f32 %v53, %v608
    %v610 = vand.u32 %v609, 4294901760
    %611 = vmatpush.msra.mxu0 %v610
    %v612 = vand.u32 %v51, 4294901760
    %v613 = vsub.f32 %v51, %v612
    %v614 = vand.u32 %v613, 4294901760
    %615 = vmatpush.msra.mxu0 %v614
    %v616 = vand.u32 %v49, 4294901760
    %v617 = vsub.f32 %v49, %v616
    %v618 = vand.u32 %v617, 4294901760
    %619 = vmatpush.msra.mxu0 %v618
    %v620 = vand.u32 %v47, 4294901760
    %v621 = vsub.f32 %v47, %v620
    %v622 = vand.u32 %v621, 4294901760
    %623 = vmatpush.msra.mxu0 %v622
    %v624 = vand.u32 %v68, 4294901760
    %625 = vmatmul.f32.gmra.mxu0 %v624
    %v626 = vpop.f32.mrf.mxu0
    %v627 = vadd.f32 %v570, %v626
    %v628 = vand.u32 %v71, 4294901760
    %629 = vmatmul.f32.gmra.mxu0 %v628
    %v630 = vpop.f32.mrf.mxu0
    %v631 = vadd.f32 %v576, %v630
    %632 = vdwg.mxu0
    %633 = vmatpush.msra.mxu0 0.0
    %634 = vmatpush.msra.mxu0 0.0
    %635 = vmatpush.msra.mxu0 0.0
    %636 = vmatpush.msra.mxu0 0.0
    %637 = vmatpush.msra.mxu0 0.0
    %638 = vmatpush.msra.mxu0 0.0
    %v639 = vand.u32 %v78, 4294901760
    %640 = vmatpush.msra.mxu0 %v639
    %v641 = vand.u32 %v63, 4294901760
    %642 = vmatpush.msra.mxu0 %v641
    %v643 = vand.u32 %v61, 4294901760
    %644 = vmatpush.msra.mxu0 %v643
    %v645 = vand.u32 %v59, 4294901760
    %646 = vmatpush.msra.mxu0 %v645
    %v647 = vand.u32 %v57, 4294901760
    %648 = vmatpush.msra.mxu0 %v647
    %v649 = vand.u32 %v55, 4294901760
    %650 = vmatpush.msra.mxu0 %v649
    %v651 = vand.u32 %v53, 4294901760
    %652 = vmatpush.msra.mxu0 %v651
    %v653 = vand.u32 %v51, 4294901760
    %654 = vmatpush.msra.mxu0 %v653
    %v655 = vand.u32 %v49, 4294901760
    %656 = vmatpush.msra.mxu0 %v655
    %v657 = vand.u32 %v47, 4294901760
    %658 = vmatpush.msra.mxu0 %v657
    %v659 = vand.u32 %v68, 4294901760
    %660 = vmatmul.f32.gmra.mxu0 %v659
    %v661 = vpop.f32.mrf.mxu0
    %v662 = vadd.f32 %v627, %v661
    %v663 = vand.u32 %v71, 4294901760
    %664 = vmatmul.f32.gmra.mxu0 %v663
    %v665 = vpop.f32.mrf.mxu0
    %v666 = vadd.f32 %v631, %v665
    %667 = vdwg.mxu0
    %668 = vst [vmem:[#allocation7] sm:$0xff] %v368
    %669 = vst [vmem:[#allocation7 + $0x8] sm:$0xff] %v662
    %670 = vst [vmem:[#allocation7 + $0x10] sm:$0xff] %v372
    %671 = vst [vmem:[#allocation7 + $0x18] sm:$0xff] %v666
    // Predicated region
    $region18: #{tpu_custom_call.1} parent=1 // pred_check
      _
    $region19: #{tpu_custom_call.1} parent=1 // pred_check_branch
      %673 = sbr.rel (0) target = $region21
    $region20: #{tpu_custom_call.1} parent=1 // pred_region
      %675 = vsyncadd [#allocation4], 0
      %s676 = sshll.u32 [#allocation7], 4
      %s677 = int_to_ptr.vmem [resolvable:$true] %s676
      %s678 = sshll.u32 %s2, 4
      %s679 = int_to_ptr.hbm [resolvable:$true] %s678
      %684 = dma.vmem_to_hbm [thread:$0]  %s677, 512, %s679, [#allocation4], 256, 256, 16
    $region21: #{tpu_custom_call.1} parent=1 // pred_fallthru
      _
    // Predicated region
    $region22: #{tpu_custom_call.1} parent=1 // pred_check
      _
    $region23: #{tpu_custom_call.1} parent=1 // pred_check_branch
      %686 = sbr.rel (0) target = $region25
    $region24: #{tpu_custom_call.1} parent=1 // pred_region
      %688 = dma.done [#allocation4], 512
    $region25: #{tpu_custom_call.1} parent=1 // pred_fallthru
      _
    %689 = vsyncpa [#allocation3], 1
    %690 = vsyncpa [#allocation6], 1
    %691 = vsyncpa [#allocation4], 1

</llo_original>
